<compile_context>
chip_gen: v7x
topology: tpu7x:2x2x1
jax: 0.10.0
libtpu: 0.0.40
codegen_flags: <defaults>
</compile_context>

<pallas_src>
import functools

import jax
import jax.numpy as jnp
from jax.experimental import pallas as pl
from jax.experimental.pallas import tpu as pltpu


def layernorm_kernel(alpha_ref, bias_ref, x_ref, o_ref, *, eps, d_valid):
    # x_ref: (TR, Dp) tile in VMEM. Upcast once; this is the only full-tile
    # f32 value that must stay live until the output FMA.
    x = x_ref[...].astype(jnp.float32)

    # One-pass statistics (f32). Padded lanes (if Dp > d_valid) are zero in
    # the input, so they drop out of both sums; divide by the TRUE hidden dim.
    s1 = jnp.sum(x, axis=-1, keepdims=True)            # (TR, 1)
    s2 = jnp.sum(x * x, axis=-1, keepdims=True)        # (TR, 1)
    mean = s1 * (1.0 / d_valid)
    # Unbiased (N-1) variance; clamp tiny negatives from E[x^2]-E[x]^2
    # cancellation (all accumulation kept in f32).
    var = jnp.maximum(s2 - s1 * mean, 0.0) * (1.0 / (d_valid - 1))

    z = eps + jnp.sqrt(var)                            # (TR, 1) column
    inv = pl.reciprocal(z, approx=True)                # EUP slot (off the VPU)
    inv = inv * (2.0 - z * inv)                        # one Newton step on the column

    alpha = alpha_ref[0].astype(jnp.float32)           # scalar from SMEM
    bias = bias_ref[0].astype(jnp.float32)
    scale = alpha * inv                                # (TR, 1)
    shift = bias - mean * scale                        # fold mean into the column

    # Single broadcast multiply-add per element over the tile.
    o_ref[...] = (x * scale + shift).astype(o_ref.dtype)


def _vmem_budget_and_limit():
    """Per-generation VMEM budget (for tile sizing) and compiler limit."""
    MiB = 1024 * 1024
    cap = 64 * MiB
    try:
        info = pltpu.get_tpu_info()
        cap = int(getattr(info, "vmem_capacity_bytes", cap))
    except Exception:
        pass
    if cap >= 96 * MiB:                  # v5e / v6e: 128 MiB physical VMEM
        return 56 * MiB, 64 * MiB
    # v7x (64 MiB per TensorCore) or unknown: stay well below physical.
    limit = min(48 * MiB, max(16 * MiB, cap - 16 * MiB))
    return max(8 * MiB, limit - 8 * MiB), limit


def _pick_row_tile(rows, d, in_itemsize, out_itemsize, vmem_budget_bytes,
                   min_grid_steps=8, max_row_tile=2048):
    """Largest sublane-aligned row tile whose live footprint fits the budget.

    Accounts for the double-buffered input + double-buffered output tiles in
    their HBM dtypes PLUS one full-tile f32 temporary inside the kernel body,
    and keeps the grid >= min_grid_steps deep (DMA/compute overlap + megacore
    sharding on the parallel axis) when the row count allows it.
    """
    per_elem_bytes = 2 * in_itemsize + 2 * out_itemsize + 4
    cap = vmem_budget_bytes // max(1, d * per_elem_bytes)
    cap = max(8, (cap // 8) * 8)
    cap = min(cap, max_row_tile)
    if rows <= 8:
        return rows                       # full-extent block (always legal)
    split = max(8, (pl.cdiv(rows, min_grid_steps) // 8) * 8)
    return min(cap, split)


def layer_norm(x, alpha, bias, *, eps=1e-6, row_tile=None):
    """LayerNorm over the last axis of x (any leading dims)."""
    orig_shape = x.shape
    d = orig_shape[-1]
    assert d > 1, "unbiased std needs hidden dim > 1"
    x2 = x.reshape(-1, d)
    rows = x2.shape[0]

    # Lane-dense hidden dim: pad D up to a multiple of 128 so output stores
    # are unmasked full-lane vst's. Padded lanes are zero and are excluded
    # from the statistics via the true `d` baked into the kernel.
    d_pad = -(-d // 128) * 128
    if d_pad != d:
        x2 = jnp.pad(x2, ((0, 0), (0, d_pad - d)))

    # Runtime scalar parameters (SMEM operands) — jit/trace friendly.
    alpha = jnp.asarray(alpha, jnp.float32).reshape(1)
    bias = jnp.asarray(bias, jnp.float32).reshape(1)

    vmem_budget, vmem_limit = _vmem_budget_and_limit()
    if row_tile is None:
        row_tile = _pick_row_tile(rows, d_pad, x2.dtype.itemsize,
                                  x.dtype.itemsize, vmem_budget)

    grid = (pl.cdiv(rows, row_tile),)
    out = pl.pallas_call(
        functools.partial(layernorm_kernel, eps=float(eps), d_valid=d),
        out_shape=jax.ShapeDtypeStruct((rows, d_pad), x.dtype),
        grid=grid,
        in_specs=[
            pl.BlockSpec(memory_space=pltpu.MemorySpace.SMEM),    # alpha (1,)
            pl.BlockSpec(memory_space=pltpu.MemorySpace.SMEM),    # bias  (1,)
            pl.BlockSpec((row_tile, d_pad), lambda i: (i, 0)),    # x tile
        ],
        out_specs=pl.BlockSpec((row_tile, d_pad), lambda i: (i, 0)),
        compiler_params=pltpu.CompilerParams(
            dimension_semantics=("parallel",),   # megacore-shardable row tiles
            vmem_limit_bytes=vmem_limit,         # tied to the sizing budget
        ),
    )(alpha, bias, x2)

    if d_pad != d:
        out = out[:, :d]
    return out.reshape(orig_shape)


if __name__ == "__main__":
    key = jax.random.PRNGKey(0)
    batch, seq, hidden = 2, 8, 32
    x = jax.random.normal(key, (batch, seq, hidden), dtype=jnp.float32)

    # Parameter init matching nn.Parameter(torch.ones(1)) / torch.zeros(1).
    alpha = jnp.ones((1,), jnp.float32)
    bias = jnp.zeros((1,), jnp.float32)
    eps = 1e-6

    out = layer_norm(x, alpha, bias, eps=eps)
    jax.block_until_ready(out)

    # Pure-JAX reference (unbiased std, eps added to std — like the PyTorch code).
    mean = x.mean(-1, keepdims=True)
    std = jnp.sqrt(((x - mean) ** 2).sum(-1, keepdims=True) / (hidden - 1))
    ref = alpha[0] * (x - mean) / (eps + std) + bias[0]

    assert jnp.allclose(out, ref, atol=1e-4, rtol=1e-4), "mismatch vs reference"
    print("KERNEL_OK")
</pallas_src>

<mosaic_0001>
module attributes {stable_mosaic.version = 11 : i64} {
  func.func @layernorm_kernel(%arg0: i32, %arg1: memref<1xf32, #tpu.memory_space<smem>>, %arg2: memref<1xf32, #tpu.memory_space<smem>>, %arg3: memref<8x128xf32, #tpu.memory_space<vmem>>, %arg4: memref<8x128xf32, #tpu.memory_space<vmem>>) attributes {dimension_semantics = [#tpu.dimension_semantics<parallel>], iteration_bounds = array<i64: 2>, scalar_prefetch = 0 : i64, scratch_operands = 0 : i64, tpu.core_type = #tpu.core_type<tc>, window_params = [{transform_indices = @transform_0, window_bounds = array<i64: 1>}, {transform_indices = @transform_1, window_bounds = array<i64: 1>}, {transform_indices = @transform_2, window_bounds = array<i64: 8, 128>}, {transform_indices = @transform_3, window_bounds = array<i64: 8, 128>}]} {
    %c0 = arith.constant 0 : index
    %c0_0 = arith.constant 0 : index
    %0 = vector.load %arg3[%c0, %c0_0] : memref<8x128xf32, #tpu.memory_space<vmem>>, vector<8x128xf32>
    %cst = arith.constant dense<0.000000e+00> : vector<8xf32>
    %1 = vector.multi_reduction <add>, %0, %cst [1] : vector<8x128xf32> to vector<8xf32>
    %2 = vector.shape_cast %1 : vector<8xf32> to vector<8x1xf32>
    %3 = arith.mulf %0, %0 : vector<8x128xf32>
    %cst_1 = arith.constant dense<0.000000e+00> : vector<8xf32>
    %4 = vector.multi_reduction <add>, %3, %cst_1 [1] : vector<8x128xf32> to vector<8xf32>
    %5 = vector.shape_cast %4 : vector<8xf32> to vector<8x1xf32>
    %cst_2 = arith.constant 3.125000e-02 : f32
    %6 = vector.broadcast %cst_2 : f32 to vector<8x1xf32>
    %7 = arith.mulf %2, %6 : vector<8x1xf32>
    %8 = arith.mulf %2, %7 : vector<8x1xf32>
    %9 = arith.subf %5, %8 : vector<8x1xf32>
    %cst_3 = arith.constant 0.000000e+00 : f32
    %10 = vector.broadcast %cst_3 : f32 to vector<8x1xf32>
    %11 = arith.maximumf %9, %10 : vector<8x1xf32>
    %cst_4 = arith.constant 0.0322580636 : f32
    %12 = vector.broadcast %cst_4 : f32 to vector<8x1xf32>
    %13 = arith.mulf %11, %12 : vector<8x1xf32>
    %14 = math.sqrt %13 : vector<8x1xf32>
    %cst_5 = arith.constant 9.99999997E-7 : f32
    %15 = vector.broadcast %cst_5 : f32 to vector<8x1xf32>
    %16 = arith.addf %15, %14 : vector<8x1xf32>
    %17 = tpu.reciprocal %16 {approx = true} : vector<8x1xf32> -> vector<8x1xf32>
    %18 = arith.mulf %16, %17 : vector<8x1xf32>
    %cst_6 = arith.constant 2.000000e+00 : f32
    %19 = vector.broadcast %cst_6 : f32 to vector<8x1xf32>
    %20 = arith.subf %19, %18 : vector<8x1xf32>
    %21 = arith.mulf %17, %20 : vector<8x1xf32>
    %c0_7 = arith.constant 0 : index
    %22 = memref.load %arg1[%c0_7] : memref<1xf32, #tpu.memory_space<smem>>
    %c0_8 = arith.constant 0 : index
    %23 = memref.load %arg2[%c0_8] : memref<1xf32, #tpu.memory_space<smem>>
    %24 = vector.broadcast %22 : f32 to vector<8x1xf32>
    %25 = arith.mulf %24, %21 : vector<8x1xf32>
    %26 = arith.mulf %7, %25 : vector<8x1xf32>
    %27 = vector.broadcast %23 : f32 to vector<8x1xf32>
    %28 = arith.subf %27, %26 : vector<8x1xf32>
    %29 = vector.broadcast %25 : vector<8x1xf32> to vector<8x128xf32>
    %30 = arith.mulf %0, %29 : vector<8x128xf32>
    %31 = vector.broadcast %28 : vector<8x1xf32> to vector<8x128xf32>
    %32 = arith.addf %30, %31 : vector<8x128xf32>
    %c0_9 = arith.constant 0 : index
    %c0_10 = arith.constant 0 : index
    %33 = vector.load %arg4[%c0_9, %c0_10] : memref<8x128xf32, #tpu.memory_space<vmem>>, vector<8x128xf32>
    tpu.vector_store %arg4[%c0_9, %c0_10], %32 {strides = array<i32>} : memref<8x128xf32, #tpu.memory_space<vmem>>, vector<8x128xf32>,
    return
  }
  func.func @transform_0(%arg0: i32) -> i32 {
    %c0_i32 = arith.constant 0 : i32
    %c0_i32_0 = arith.constant 0 : i32
    return %c0_i32 : i32
  }
  func.func @transform_1(%arg0: i32) -> i32 {
    %c0_i32 = arith.constant 0 : i32
    %c0_i32_0 = arith.constant 0 : i32
    return %c0_i32 : i32
  }
  func.func @transform_2(%arg0: i32) -> (i32, i32) {
    %c0_i32 = arith.constant 0 : i32
    %c0_i32_0 = arith.constant 0 : i32
    return %arg0, %c0_i32 : i32, i32
  }
  func.func @transform_3(%arg0: i32) -> (i32, i32) {
    %c0_i32 = arith.constant 0 : i32
    %c0_i32_0 = arith.constant 0 : i32
    return %arg0, %c0_i32 : i32, i32
  }
}

</mosaic_0001>

<llo_original>
// kernel: tpu_custom_call.1
$region0: #{tpu_custom_call.1}
  #allocation0 [shape = 'u32[]', space=smem, size = 0x4, offset = 0x4, fixed_abs, tag = 'smem constant byte address 0x4 - core index']
  #allocation1 [shape = 'u32[144,128]{1,0:T(1,128)}', space=vmem, size = 0x12000, scoped, tag = 'internal scratch']
  #allocation2 [shape = 'f32[1]{0:T(128)S(6)}', space=smem, size = 0x200, scoped, tag = 'scoped memory for tpu_custom_call.1']
  #allocation3 [shape = 'f32[1]{0:T(128)S(6)}', space=smem, size = 0x200, scoped, tag = 'scoped memory for tpu_custom_call.1']
  %s0 = inlined_call_operand.<no memory space> [shape: f32[1], index: 0, kind: input, shape index: {}]
  %s1 = inlined_call_operand.<no memory space> [shape: f32[1], index: 1, kind: input, shape index: {}]
  %s2 = inlined_call_operand.hbm [shape: f32[16,128], index: 2, kind: input, shape index: {}]
  %s3 = inlined_call_operand.hbm [shape: f32[16,128], index: 3, kind: output, shape index: {}]
  %s4 = sld [smem:[#allocation0]]
  $region49: #{tpu_custom_call.1} parent=0
    _
  %s6 = ssub.s32 1, %s4
  %s7 = scalar_select 0, %s6, %s4
  %8 = sst [smem:[#allocation2]] %s0
  %9 = sst [smem:[#allocation3]] %s1
  $region1: #{tpu_custom_call.1} parent=0
    #allocation4 [shape = 'u8[8192]{0}', space=vmem, size = 0x2000, scoped, tag = 'input window, operand 2']
    #allocation5 [shape = 's32[2]{0}', space=sflag, size = 0x8, scoped, tag = 'scoped memory for tpu_custom_call.1']
    #allocation6 [shape = 's32[2]{0}', space=sflag, size = 0x8, scoped, tag = 'scoped memory for tpu_custom_call.1']
    #allocation7 [shape = 'u8[8192]{0}', space=vmem, size = 0x2000, scoped, tag = 'output window, operand 0']
    %10 = vsyncpa [#allocation5], 0
    %s11 = scalar_lea.sflag [#allocation5], 1
    %12 = vsyncpa %s11, 0
    %13 = vsyncpa [#allocation6], 0
    %s14 = scalar_lea.sflag [#allocation6], 1
    %15 = vsyncpa %s14, 0
    loop: start=0, step=1, limit=4
    $region2: #{tpu_custom_call.1} parent=1 // loop_pre_header
      _
    $region3: #{tpu_custom_call.1} parent=1 // loop_header
      %s17 = sphi 0, %s21
      %p18 = scmp.ge.s32.totalorder %s17, 4
      %s25 = sphi 0, %s25
      %s27 = sphi 0, %s25
      %s28 = sphi 0, %s27
      %s42 = sphi 0, %s28
      %s46 = sphi 0, %s46
      %s48 = sphi 0, %s46
      %s49 = sphi 0, %s48
      %s63 = sphi 0, %s49
      %s69 = sphi 0, %s71
      %s72 = sphi 0, %s69
      %s73 = sphi 0, %s72
      %s89 = sphi 0, %s73
      %s95 = sphi 0, %s97
      %s98 = sphi 0, %s95
      %s99 = sphi 0, %s98
      %s115 = sphi 0, %s99
    $region4: #{tpu_custom_call.1} parent=1 // loop_header_branch
      %20 = sbr.rel (%p18) target = $region8
    $region5: #{tpu_custom_call.1} parent=1 // loop_body
      %s22 = ssub.s32 %s17, 1
      %s23 = ssub.s32 %s17, 2
      %s24 = sadd.s32 %s17, 1
      %s26 = sadd.s32 %s25, 1
      %p29 = scmp.eq.s32.totalorder %s17, 1
      %p30 = scmp.ne.s32.totalorder %s25, %s27
      %p31 = scmp.eq.s32.totalorder %s17, 0
      %p32 = por %p30, %p31
      %p33 = scmp.ne.s32.totalorder %s25, %s27
      %p34 = scmp.eq.s32.totalorder %s22, 1
      %p35 = por %p33, %p34
      %p36 = scmp.ne.s32.totalorder %s27, %s28
      %p37 = scmp.eq.s32.totalorder %s22, 0
      %p38 = por %p36, %p37
      %p39 = scmp.ne.s32.totalorder %s27, %s28
      %p40 = scmp.eq.s32.totalorder %s23, 1
      %p41 = por %p39, %p40
      %p43 = scmp.ne.s32.totalorder %s28, %s42
      %p44 = scmp.eq.s32.totalorder %s23, 0
      %p45 = por %p43, %p44
      %s47 = sadd.s32 %s46, 1
      %p50 = scmp.eq.s32.totalorder %s17, 1
      %p51 = scmp.ne.s32.totalorder %s46, %s48
      %p52 = scmp.eq.s32.totalorder %s17, 0
      %p53 = por %p51, %p52
      %p54 = scmp.ne.s32.totalorder %s46, %s48
      %p55 = scmp.eq.s32.totalorder %s22, 1
      %p56 = por %p54, %p55
      %p57 = scmp.ne.s32.totalorder %s48, %s49
      %p58 = scmp.eq.s32.totalorder %s22, 0
      %p59 = por %p57, %p58
      %p60 = scmp.ne.s32.totalorder %s48, %s49
      %p61 = scmp.eq.s32.totalorder %s23, 1
      %p62 = por %p60, %p61
      %p64 = scmp.ne.s32.totalorder %s49, %s63
      %p65 = scmp.eq.s32.totalorder %s23, 0
      %p66 = por %p64, %p65
      %s67 = ssub.s32 %s17, %s24
      %p68 = scmp.eq.s32.totalorder %s67, 0
      %s70 = sadd.s32 %s69, 1
      %s71 = scalar_select %p68, %s69, %s70
      %p74 = pneg %p68
      %p75 = scmp.eq.s32.totalorder %s17, 1
      %p76 = por %p74, %p75
      %p77 = scmp.ne.s32.totalorder %s69, %s72
      %p78 = scmp.eq.s32.totalorder %s17, 0
      %p79 = por %p77, %p78
      %p80 = scmp.ne.s32.totalorder %s69, %s72
      %p81 = scmp.eq.s32.totalorder %s22, 1
      %p82 = por %p80, %p81
      %p83 = scmp.ne.s32.totalorder %s72, %s73
      %p84 = scmp.eq.s32.totalorder %s22, 0
      %p85 = por %p83, %p84
      %p86 = scmp.ne.s32.totalorder %s72, %s73
      %p87 = scmp.eq.s32.totalorder %s23, 1
      %p88 = por %p86, %p87
      %p90 = scmp.ne.s32.totalorder %s73, %s89
      %p91 = scmp.eq.s32.totalorder %s23, 0
      %p92 = por %p90, %p91
      %s93 = ssub.s32 %s17, %s24
      %p94 = scmp.eq.s32.totalorder %s93, 0
      %s96 = sadd.s32 %s95, 1
      %s97 = scalar_select %p94, %s95, %s96
      %p100 = pneg %p94
      %p101 = scmp.eq.s32.totalorder %s17, 1
      %p102 = por %p100, %p101
      %p103 = scmp.ne.s32.totalorder %s95, %s98
      %p104 = scmp.eq.s32.totalorder %s17, 0
      %p105 = por %p103, %p104
      %p106 = scmp.ne.s32.totalorder %s95, %s98
      %p107 = scmp.eq.s32.totalorder %s22, 1
      %p108 = por %p106, %p107
      %p109 = scmp.ne.s32.totalorder %s98, %s99
      %p110 = scmp.eq.s32.totalorder %s22, 0
      %p111 = por %p109, %p110
      %p112 = scmp.ne.s32.totalorder %s98, %s99
      %p113 = scmp.eq.s32.totalorder %s23, 1
      %p114 = por %p112, %p113
      %p116 = scmp.ne.s32.totalorder %s99, %s115
      %p117 = scmp.eq.s32.totalorder %s23, 0
      %p118 = por %p116, %p117
      %p119 = scmp.le.s32.totalorder 1, %s17
      %p120 = scmp.lt.s32.totalorder %s17, 3
      %p121 = pnand %p119, %p120
      %p122 = pneg %p121
      // Predicated region
      $region9: #{tpu_custom_call.1} parent=5 // pred_check
        _
      $region10: #{tpu_custom_call.1} parent=5 // pred_check_branch
        %124 = sbr.rel (%p121) target = $region12
      $region11: #{tpu_custom_call.1} parent=5 // pred_region
        %s125 = ssub.s32 %s17, 1
        // Predicated region
        $region13: #{tpu_custom_call.1} parent=11 // pred_check
          %p126 = pneg %p38
        $region14: #{tpu_custom_call.1} parent=11 // pred_check_branch
          %128 = sbr.rel (%p126) target = $region16
        $region15: #{tpu_custom_call.1} parent=11 // pred_region
          _
        $region16: #{tpu_custom_call.1} parent=11 // pred_fallthru
          _
        // Predicated region
        $region17: #{tpu_custom_call.1} parent=11 // pred_check
          %p129 = pneg %p59
        $region18: #{tpu_custom_call.1} parent=11 // pred_check_branch
          %131 = sbr.rel (%p129) target = $region20
        $region19: #{tpu_custom_call.1} parent=11 // pred_region
          _
        $region20: #{tpu_custom_call.1} parent=11 // pred_fallthru
          _
      $region12: #{tpu_custom_call.1} parent=5 // pred_fallthru
        _
      %p132 = scmp.lt.s32.totalorder %s17, 2
      // Predicated region
      $region21: #{tpu_custom_call.1} parent=5 // pred_check
        %p133 = pneg %p132
      $region22: #{tpu_custom_call.1} parent=5 // pred_check_branch
        %135 = sbr.rel (%p133) target = $region24
      $region23: #{tpu_custom_call.1} parent=5 // pred_region
        // Predicated region
        $region25: #{tpu_custom_call.1} parent=23 // pred_check
          %p136 = pneg %p79
        $region26: #{tpu_custom_call.1} parent=23 // pred_check_branch
          %138 = sbr.rel (%p136) target = $region28
        $region27: #{tpu_custom_call.1} parent=23 // pred_region
          %s139 = sand.u32 %s69, 1
          %s140 = scalar_lea.sflag [#allocation5], %s139
          %s141 = sand.u32 %s69, 1
          %s142 = smul.addr %s141, 8
          %s143 = scalar_lea.vmem [#allocation4], %s142
          %s145 = ssub.s32 128, 128
          %146 = vsyncadd %s140, %s145
          %s147 = smul.addr %s17, 128
          %s148 = scalar_lea.hbm %s2, %s147
          %s150 = sshll.u32 %s143, 4
          %s151 = int_to_ptr.vmem [resolvable:$true] %s150
          %153 = dma.hbm_to_vmem [thread:$0]  %s148, 128, %s151, %s140
        $region28: #{tpu_custom_call.1} parent=23 // pred_fallthru
          _
      $region24: #{tpu_custom_call.1} parent=5 // pred_fallthru
        _
      %p154 = scmp.le.s32.totalorder 1, %s17
      %p155 = scmp.lt.s32.totalorder %s17, 3
      %p156 = pnand %p154, %p155
      %p157 = pneg %p156
      // Predicated region
      $region29: #{tpu_custom_call.1} parent=5 // pred_check
        _
      $region30: #{tpu_custom_call.1} parent=5 // pred_check_branch
        %159 = sbr.rel (%p156) target = $region32
      $region31: #{tpu_custom_call.1} parent=5 // pred_region
        %s160 = ssub.s32 %s17, 1
        %s161 = sand.u32 %s72, 1
        %s162 = scalar_lea.sflag [#allocation5], %s161
        %s163 = sand.u32 %s72, 1
        %s164 = smul.addr %s163, 8
        %s165 = scalar_lea.vmem [#allocation4], %s164
        // Predicated region
        $region33: #{tpu_custom_call.1} parent=31 // pred_check
          %p166 = pneg %p85
        $region34: #{tpu_custom_call.1} parent=31 // pred_check_branch
          %168 = sbr.rel (%p166) target = $region36
        $region35: #{tpu_custom_call.1} parent=31 // pred_region
          %169 = dma.done %s162, 128
        $region36: #{tpu_custom_call.1} parent=31 // pred_fallthru
          _
        %p170 = pneg %p38
        %p171 = pneg %p35
        %p172 = pneg %p59
        %p173 = pneg %p56
        %s174 = sand.u32 %s72, 1
        %s175 = scalar_lea.sflag [#allocation5], %s174
        %s176 = sand.u32 %s72, 1
        %s177 = smul.addr %s176, 8
        %s178 = scalar_lea.vmem [#allocation4], %s177
        %p179 = pneg %p85
        %p180 = pneg %p82
        %p181 = pneg %p111
        %p182 = pneg %p108
        %s183 = sand.u32 %s98, 1
        %s184 = scalar_lea.sflag [#allocation6], %s183
        %s185 = sand.u32 %s98, 1
        %s186 = smul.addr %s185, 8
        %s187 = scalar_lea.vmem [#allocation7], %s186
        %v188 = vld [vmem:[%s165] sm:$0xff]
        %189 = vadd.xlane.f32.xlu0 %v188
        %v190 = vpop.xlane.xlu0 %189
        %v191 = vmul.f32 %v188, %v188
        %192 = vadd.xlane.f32.xlu0 %v191
        %v193 = vpop.xlane.xlu0 %192
        %v194 = vmul.f32 %v190, 0.03125
        %v195 = vmul.f32 %v190, %v194
        %v196 = vsub.f32 %v193, %v195
        %v197 = vmax.f32 %v196, 0.0
        %v198 = vmul.f32 %v197, 0.032258064
        %v199 = vrsqrt.pop %v198
        %v200 = vmul.f32 %v198, %v199
        %vm201 = vcmp.eq.f32.partialorder %v198, inf
        %v202 = vsel %vm201, %v198, %v200
        %vm203 = vcmp.eq.f32.partialorder %v198, 0.0
        %v204 = vand.u32 %v198, 2147483648
        %v205 = vsel %vm203, %v204, %v202
        %v206 = vadd.f32 %v205, 1e-06
        %v207 = vrcp.pop %v206
        %v208 = vmul.f32 %v206, %v207
        %v209 = vsub.f32 2.0, %v208
        %v210 = vmul.f32 %v207, %v209
        %s211 = sld [smem:[#allocation2]]
        %s212 = sld [smem:[#allocation3]]
        %v213 = vstv %s211
        %v214 = vmul.f32 %v213, %v210
        %v215 = vmul.f32 %v194, %v214
        %v216 = vstv %s212
        %v217 = vsub.f32 %v216, %v215
        %v218 = vmul.f32 %v188, %v214
        %v219 = vadd.f32 %v218, %v217
        %220 = vst [vmem:[%s187] sm:$0xff] %v219
        %s221 = sand.u32 %s98, 1
        %s222 = scalar_lea.sflag [#allocation6], %s221
        %s223 = sand.u32 %s98, 1
        %s224 = smul.addr %s223, 8
        %s225 = scalar_lea.vmem [#allocation7], %s224
        // Predicated region
        $region37: #{tpu_custom_call.1} parent=31 // pred_check
          %p226 = pneg %p108
        $region38: #{tpu_custom_call.1} parent=31 // pred_check_branch
          %228 = sbr.rel (%p226) target = $region40
        $region39: #{tpu_custom_call.1} parent=31 // pred_region
          %s230 = ssub.s32 128, 128
          %231 = vsyncadd %s222, %s230
          %s232 = smul.addr %s22, 128
          %s233 = scalar_lea.hbm %s3, %s232
          %s235 = sshll.u32 %s225, 4
          %s236 = int_to_ptr.vmem [resolvable:$true] %s235
          %238 = dma.vmem_to_hbm [thread:$0]  %s236, 128, %s233, %s222
        $region40: #{tpu_custom_call.1} parent=31 // pred_fallthru
          _
      $region32: #{tpu_custom_call.1} parent=5 // pred_fallthru
        _
      %p239 = scmp.le.s32.totalorder 2, %s17
      // Predicated region
      $region41: #{tpu_custom_call.1} parent=5 // pred_check
        %p240 = pneg %p239
      $region42: #{tpu_custom_call.1} parent=5 // pred_check_branch
        %242 = sbr.rel (%p240) target = $region44
      $region43: #{tpu_custom_call.1} parent=5 // pred_region
        %s243 = ssub.s32 %s17, 2
        // Predicated region
        $region45: #{tpu_custom_call.1} parent=43 // pred_check
          %p244 = pneg %p114
        $region46: #{tpu_custom_call.1} parent=43 // pred_check_branch
          %246 = sbr.rel (%p244) target = $region48
        $region47: #{tpu_custom_call.1} parent=43 // pred_region
          %s247 = sand.u32 %s99, 1
          %s248 = scalar_lea.sflag [#allocation6], %s247
          %s249 = sand.u32 %s99, 1
          %s250 = smul.addr %s249, 8
          %s251 = scalar_lea.vmem [#allocation7], %s250
          %252 = dma.done %s248, 128
        $region48: #{tpu_custom_call.1} parent=43 // pred_fallthru
          _
      $region44: #{tpu_custom_call.1} parent=5 // pred_fallthru
        _
    $region6: #{tpu_custom_call.1} parent=1 // loop_footer
      %s21 = sadd.s32 1, %s17
    $region7: #{tpu_custom_call.1} parent=1 // loop_footer_branch
      %16 = sbr.rel target = $region3
    $region8: #{tpu_custom_call.1} parent=1 // loop_exit
      _
    %253 = vsyncpa [#allocation5], 1
    %s254 = scalar_lea.sflag [#allocation5], 1
    %255 = vsyncpa %s254, 1
    %256 = vsyncpa [#allocation6], 1
    %s257 = scalar_lea.sflag [#allocation6], 1
    %258 = vsyncpa %s257, 1

</llo_original>
